<compile_context>
chip_gen: v7x
topology: tpu7x:2x2x1
jax: 0.10.0
libtpu: 0.0.40
codegen_flags: <defaults>
</compile_context>

<pallas_src>
import functools
import math

import jax
import jax.numpy as jnp
from jax.experimental import pallas as pl
from jax.experimental.pallas import tpu as pltpu


def _round_up(v, m):
    return (v + m - 1) // m * m


def _disp_head_kernel(x_ref, w_ref, b_ref, o_ref, *, wp, padded_out, nb):
    # x_ref: (nb, Cp, L) VMEM   activations, spatially padded + flattened
    # w_ref: (16, Cp)    VMEM   conv taps on sublanes (9 used), channels on lanes
    # b_ref: (1,)        SMEM   bias scalar
    # o_ref: (nb, 1, padded_out) VMEM, lane-dense (multiple of 128)
    bias = b_ref[0]
    for b in range(nb):                      # static unroll over fused batches
        # Channel contraction on the MXU, f32 accumulation (no input dtype copies).
        z = jnp.dot(w_ref[...], x_ref[b],
                    preferred_element_type=jnp.float32)          # (16, L) f32
        # Tap k=(dy,dx) contributes z[k, p + dy*WP + dx] to output lane p.
        taps = []
        for k in range(9):
            off = (k // 3) * wp + (k % 3)
            taps.append(z[k:k + 1, off:off + padded_out])
        # Balanced add tree (shallower dependence chain than a serial sum).
        while len(taps) > 1:
            nxt = [taps[i] + taps[i + 1] for i in range(0, len(taps) - 1, 2)]
            if len(taps) % 2:
                nxt.append(taps[-1])
            taps = nxt
        o_ref[b] = jax.nn.sigmoid(taps[0] + bias).astype(o_ref.dtype)


def _pick_batches_per_step(n, per_batch_bytes, target_bytes=8 << 20):
    """Largest divisor of n keeping >= 2 grid steps (v7x: both TCs busy) and the
    per-step input block under ~8 MiB."""
    # TODO(synk): for very large feature maps (per-batch block > target) add spatial
    # row-block tiling with a 2-row halo instead of falling back to nb=1.
    best = 1
    for nb in range(1, n + 1):
        if n % nb:
            continue
        if nb * per_batch_bytes > target_bytes:
            break
        if n // nb >= 2 or n == 1:
            best = nb
    return best


def newcrfs_disp_head(x, scale, weight, bias):
    """x: (N, C, H, W); weight: (1, C, 3, 3); bias: (1,). Returns (N, 1, H*s, W*s)."""
    n, c, h, w = x.shape
    wp = w + 2
    out_len = h * wp                              # flat conv-output span per image
    padded_out = _round_up(out_len, 128)          # lane-dense store width
    itemsize = jnp.dtype(x.dtype).itemsize
    cp_mult = {4: 8, 2: 16, 1: 32}.get(itemsize, 8)
    cp = _round_up(c, cp_mult)                    # sublane-aligned channel count

    # Largest tap offset is 2*WP + 2; add enough extra zero rows at the bottom so
    # every shifted slice of length padded_out stays in bounds — with a SINGLE pad.
    extra_rows = -(-(padded_out - out_len + 2) // wp)        # ceil div
    rows = h + 2 + extra_rows
    l_pad = rows * wp                              # flat length (WP multiple keeps the
                                                   # post-pad reshape a free bitcast)

    x_flat = jnp.pad(
        x, ((0, 0), (0, cp - c), (1, 1 + extra_rows), (1, 1))
    ).reshape(n, cp, l_pad)                        # (N, Cp, L) — one extra HBM pass

    # Conv weights: 9 taps on sublanes (padded to 16 rows), channels on lanes.
    w16 = jnp.zeros((16, cp), x.dtype).at[:9, :c].set(
        weight.reshape(c, 9).T.astype(x.dtype))
    b_smem = bias.reshape(1).astype(jnp.float32)

    per_batch_in_bytes = cp * l_pad * itemsize
    nb = _pick_batches_per_step(n, per_batch_in_bytes)
    steps = n // nb

    # Explicit VMEM budget: double-buffered in/out blocks + weights, v7x-safe cap.
    in_bytes = nb * per_batch_in_bytes
    out_bytes = nb * 8 * padded_out * itemsize     # size-1 sublane dim pads to 8
    w_bytes = 16 * cp * 4
    vmem_limit = int(min(max(2 * (in_bytes + out_bytes + w_bytes) + (1 << 20),
                             4 << 20), 32 << 20))

    kernel = functools.partial(_disp_head_kernel, wp=wp, padded_out=padded_out, nb=nb)

    out_flat = pl.pallas_call(
        kernel,
        out_shape=jax.ShapeDtypeStruct((n, 1, padded_out), x.dtype),
        grid=(steps,),
        in_specs=[
            pl.BlockSpec((nb, cp, l_pad), lambda i: (i, 0, 0)),      # activations
            pl.BlockSpec((16, cp), lambda i: (0, 0)),                # conv weights
            pl.BlockSpec(memory_space=pltpu.MemorySpace.SMEM),       # bias scalar
        ],
        out_specs=pl.BlockSpec((nb, 1, padded_out), lambda i: (i, 0, 0)),
        compiler_params=pltpu.CompilerParams(
            dimension_semantics=("parallel",),
            vmem_limit_bytes=vmem_limit),
    )(x_flat, w16, b_smem)

    # Crop the 128-padding and the 2 padded columns per row back to (N, 1, H, W).
    y = out_flat[:, :, :out_len].reshape(n, 1, h, wp)[:, :, :, :w]

    if scale > 1:
        # TODO(synk): bilinear upsample (F.interpolate, align_corners=False) is done
        # outside the Pallas kernel with jax.image.resize (matches for integer scales).
        y = jax.image.resize(y, (n, 1, h * scale, w * scale), method="bilinear")
    return y


def init_params(key, input_dim=100):
    """PyTorch Conv2d(input_dim, 1, 3) default init shapes/bounds."""
    fan_in = input_dim * 3 * 3
    bound = 1.0 / math.sqrt(fan_in)
    kw, kb = jax.random.split(key)
    weight = jax.random.uniform(kw, (1, input_dim, 3, 3), jnp.float32, -bound, bound)
    bias = jax.random.uniform(kb, (1,), jnp.float32, -bound, bound)
    return weight, bias


def disp_head_reference(x, weight, bias, scale):
    """Pure-JAX reference of the PyTorch forward (for validation)."""
    y = jax.lax.conv_general_dilated(
        x, weight, window_strides=(1, 1), padding="SAME",
        dimension_numbers=("NCHW", "OIHW", "NCHW"),
        preferred_element_type=jnp.float32)
    y = jax.nn.sigmoid(y + bias.reshape(1, 1, 1, 1)).astype(x.dtype)
    if scale > 1:
        n, c1, h, w = y.shape
        y = jax.image.resize(y, (n, c1, h * scale, w * scale), method="bilinear")
    return y


if __name__ == "__main__":
    key = jax.random.PRNGKey(0)
    kx, kp = jax.random.split(key)

    N, C, H, W = 2, 100, 16, 16          # input_dim=100 matches the module default
    x = jax.random.normal(kx, (N, C, H, W), jnp.float32)
    weight, bias = init_params(kp, C)

    out = jax.block_until_ready(newcrfs_disp_head(x, 1, weight, bias))
    ref = disp_head_reference(x, weight, bias, 1)
    assert out.shape == (N, 1, H, W)
    assert jnp.allclose(out, ref, atol=2e-3, rtol=2e-3), "scale=1 mismatch vs reference"

    out2 = jax.block_until_ready(newcrfs_disp_head(x, 2, weight, bias))
    ref2 = disp_head_reference(x, weight, bias, 2)
    assert out2.shape == (N, 1, 2 * H, 2 * W)
    assert jnp.allclose(out2, ref2, atol=2e-3, rtol=2e-3), "scale=2 mismatch vs reference"

    print("KERNEL_OK")
</pallas_src>

<mosaic_0001>
module attributes {stable_mosaic.version = 11 : i64} {
  func.func @_disp_head_kernel(%arg0: i32, %arg1: memref<1x104x432xf32, #tpu.memory_space<vmem>>, %arg2: memref<16x104xf32, #tpu.memory_space<vmem>>, %arg3: memref<1xf32, #tpu.memory_space<smem>>, %arg4: memref<1x1x384xf32, #tpu.memory_space<vmem>>) attributes {dimension_semantics = [#tpu.dimension_semantics<parallel>], iteration_bounds = array<i64: 2>, scalar_prefetch = 0 : i64, scratch_operands = 0 : i64, tpu.core_type = #tpu.core_type<tc>, window_params = [{transform_indices = @transform_0, window_bounds = array<i64: 1, 104, 432>}, {pipeline_mode = #tpu.pipeline_mode<synchronous>, transform_indices = @transform_1, window_bounds = array<i64: 16, 104>}, {transform_indices = @transform_2, window_bounds = array<i64: 1>}, {transform_indices = @transform_3, window_bounds = array<i64: 1, 1, 384>}]} {
    %c0 = arith.constant 0 : index
    %0 = memref.load %arg3[%c0] : memref<1xf32, #tpu.memory_space<smem>>
    %c0_0 = arith.constant 0 : index
    %c0_1 = arith.constant 0 : index
    %1 = vector.load %arg2[%c0_0, %c0_1] : memref<16x104xf32, #tpu.memory_space<vmem>>, vector<16x104xf32>
    %c0_2 = arith.constant 0 : index
    %c0_3 = arith.constant 0 : index
    %c0_4 = arith.constant 0 : index
    %2 = vector.load %arg1[%c0_2, %c0_3, %c0_4] : memref<1x104x432xf32, #tpu.memory_space<vmem>>, vector<1x104x432xf32>
    %3 = vector.shape_cast %2 : vector<1x104x432xf32> to vector<104x432xf32>
    %cst = arith.constant dense<0.000000e+00> : vector<16x432xf32>
    %4 = tpu.matmul %1, %3, %cst {dimension_numbers = #tpu.dot_dimension_numbers<[1], [0], [0], [1], [0, 0, 1, 1], [], []>} : vector<16x104xf32>, vector<104x432xf32>, vector<16x432xf32> -> vector<16x432xf32>
    %5 = vector.extract_strided_slice %4 {offsets = [0, 0], sizes = [1, 384], strides = [1, 1]} : vector<16x432xf32> to vector<1x384xf32>
    %6 = vector.extract_strided_slice %4 {offsets = [1, 1], sizes = [1, 384], strides = [1, 1]} : vector<16x432xf32> to vector<1x384xf32>
    %7 = vector.extract_strided_slice %4 {offsets = [2, 2], sizes = [1, 384], strides = [1, 1]} : vector<16x432xf32> to vector<1x384xf32>
    %8 = vector.extract_strided_slice %4 {offsets = [3, 18], sizes = [1, 384], strides = [1, 1]} : vector<16x432xf32> to vector<1x384xf32>
    %9 = vector.extract_strided_slice %4 {offsets = [4, 19], sizes = [1, 384], strides = [1, 1]} : vector<16x432xf32> to vector<1x384xf32>
    %10 = vector.extract_strided_slice %4 {offsets = [5, 20], sizes = [1, 384], strides = [1, 1]} : vector<16x432xf32> to vector<1x384xf32>
    %11 = vector.extract_strided_slice %4 {offsets = [6, 36], sizes = [1, 384], strides = [1, 1]} : vector<16x432xf32> to vector<1x384xf32>
    %12 = vector.extract_strided_slice %4 {offsets = [7, 37], sizes = [1, 384], strides = [1, 1]} : vector<16x432xf32> to vector<1x384xf32>
    %13 = vector.extract_strided_slice %4 {offsets = [8, 38], sizes = [1, 384], strides = [1, 1]} : vector<16x432xf32> to vector<1x384xf32>
    %14 = arith.addf %5, %6 : vector<1x384xf32>
    %15 = arith.addf %7, %8 : vector<1x384xf32>
    %16 = arith.addf %9, %10 : vector<1x384xf32>
    %17 = arith.addf %11, %12 : vector<1x384xf32>
    %18 = arith.addf %14, %15 : vector<1x384xf32>
    %19 = arith.addf %16, %17 : vector<1x384xf32>
    %20 = arith.addf %18, %19 : vector<1x384xf32>
    %21 = arith.addf %20, %13 : vector<1x384xf32>
    %22 = vector.broadcast %0 : f32 to vector<1x384xf32>
    %23 = arith.addf %21, %22 : vector<1x384xf32>
    %24 = arith.negf %23 : vector<1x384xf32>
    %25 = math.exp %24 : vector<1x384xf32>
    %cst_5 = arith.constant 1.000000e+00 : f32
    %26 = vector.broadcast %cst_5 : f32 to vector<1x384xf32>
    %27 = arith.addf %26, %25 : vector<1x384xf32>
    %28 = arith.divf %26, %27 : vector<1x384xf32>
    %c0_6 = arith.constant 0 : index
    %c0_7 = arith.constant 0 : index
    %c0_8 = arith.constant 0 : index
    %29 = vector.load %arg4[%c0_6, %c0_7, %c0_8] : memref<1x1x384xf32, #tpu.memory_space<vmem>>, vector<1x1x384xf32>
    %30 = vector.shape_cast %29 : vector<1x1x384xf32> to vector<1x384xf32>
    %31 = vector.shape_cast %28 : vector<1x384xf32> to vector<1x1x384xf32>
    tpu.vector_store %arg4[%c0_6, %c0_7, %c0_8], %31 {strides = array<i32>} : memref<1x1x384xf32, #tpu.memory_space<vmem>>, vector<1x1x384xf32>,
    return
  }
  func.func @transform_0(%arg0: i32) -> (i32, i32, i32) {
    %c0_i32 = arith.constant 0 : i32
    %c0_i32_0 = arith.constant 0 : i32
    %c0_i32_1 = arith.constant 0 : i32
    return %arg0, %c0_i32, %c0_i32_0 : i32, i32, i32
  }
  func.func @transform_1(%arg0: i32) -> (i32, i32) {
    %c0_i32 = arith.constant 0 : i32
    %c0_i32_0 = arith.constant 0 : i32
    %c0_i32_1 = arith.constant 0 : i32
    return %c0_i32, %c0_i32_0 : i32, i32
  }
  func.func @transform_2(%arg0: i32) -> i32 {
    %c0_i32 = arith.constant 0 : i32
    %c0_i32_0 = arith.constant 0 : i32
    return %c0_i32 : i32
  }
  func.func @transform_3(%arg0: i32) -> (i32, i32, i32) {
    %c0_i32 = arith.constant 0 : i32
    %c0_i32_0 = arith.constant 0 : i32
    %c0_i32_1 = arith.constant 0 : i32
    return %arg0, %c0_i32, %c0_i32_0 : i32, i32, i32
  }
}

</mosaic_0001>

<llo_original>
// kernel: tpu_custom_call.1
$region0: #{tpu_custom_call.1}
  #allocation0 [shape = 'u32[]', space=smem, size = 0x4, offset = 0x4, fixed_abs, tag = 'smem constant byte address 0x4 - core index']
  #allocation1 [shape = 'u32[144,128]{1,0:T(1,128)}', space=vmem, size = 0x12000, scoped, tag = 'internal scratch']
  #allocation2 [shape = 'f32[1]{0:T(128)S(6)}', space=smem, size = 0x200, scoped, tag = 'scoped memory for tpu_custom_call.1']
  %s0 = inlined_call_operand.hbm [shape: f32[2,104,432], index: 0, kind: input, shape index: {}]
  %s1 = inlined_call_operand.hbm [shape: f32[16,104], index: 1, kind: input, shape index: {}]
  %s2 = inlined_call_operand.<no memory space> [shape: f32[1], index: 2, kind: input, shape index: {}]
  %s3 = inlined_call_operand.hbm [shape: f32[2,1,384], index: 3, kind: output, shape index: {}]
  %s4 = sld [smem:[#allocation0]]
  $region53: #{tpu_custom_call.1} parent=0
    _
  %s6 = ssub.s32 1, %s4
  %s7 = scalar_select 0, %s6, %s4
  %8 = sst [smem:[#allocation2]] %s2
  $region1: #{tpu_custom_call.1} parent=0
    #allocation3 [shape = 'u8[425984]{0}', space=vmem, size = 0x68000, scoped, tag = 'input window, operand 0']
    #allocation4 [shape = 's32[2]{0}', space=sflag, size = 0x8, scoped, tag = 'scoped memory for tpu_custom_call.1']
    #allocation5 [shape = 's32[2]{0}', space=sflag, size = 0x8, scoped, tag = 'scoped memory for tpu_custom_call.1']
    #allocation6 [shape = 'u8[8192]{0}', space=vmem, size = 0x2000, scoped, tag = 'input window, operand 1, single buffered']
    #allocation7 [shape = 's32[1]{0}', space=sflag, size = 0x4, scoped, tag = 'scoped memory for tpu_custom_call.1']
    #allocation8 [shape = 'u8[3072]{0}', space=vmem, size = 0xc00, scoped, tag = 'output window, operand 0']
    %9 = vsyncpa [#allocation4], 0
    %s10 = scalar_lea.sflag [#allocation4], 1
    %11 = vsyncpa %s10, 0
    %12 = vsyncpa [#allocation7], 0
    %13 = vsyncpa [#allocation5], 0
    %s14 = scalar_lea.sflag [#allocation5], 1
    %15 = vsyncpa %s14, 0
    loop: start=0, step=1, limit=4
    $region2: #{tpu_custom_call.1} parent=1 // loop_pre_header
      _
    $region3: #{tpu_custom_call.1} parent=1 // loop_header
      %s17 = sphi 0, %s21
      %p18 = scmp.ge.s32.totalorder %s17, 4
      %s27 = sphi 0, %s29
      %s30 = sphi 0, %s27
      %s31 = sphi 0, %s30
      %s47 = sphi 0, %s31
      %s51 = sphi 0, %s51
      %s53 = sphi 0, %s51
      %s54 = sphi 0, %s53
      %s68 = sphi 0, %s54
      %s72 = sphi 0, %s72
      %s74 = sphi 0, %s72
      %s75 = sphi 0, %s74
      %s89 = sphi 0, %s75
      %s95 = sphi 0, %s97
      %s98 = sphi 0, %s95
      %s99 = sphi 0, %s98
      %s115 = sphi 0, %s99
    $region4: #{tpu_custom_call.1} parent=1 // loop_header_branch
      %20 = sbr.rel (%p18) target = $region8
    $region5: #{tpu_custom_call.1} parent=1 // loop_body
      %s22 = ssub.s32 %s17, 1
      %s23 = ssub.s32 %s17, 2
      %s24 = sadd.s32 %s17, 1
      %s25 = ssub.s32 %s17, %s24
      %p26 = scmp.eq.s32.totalorder %s25, 0
      %s28 = sadd.s32 %s27, 1
      %s29 = scalar_select %p26, %s27, %s28
      %p32 = pneg %p26
      %p33 = scmp.eq.s32.totalorder %s17, 1
      %p34 = por %p32, %p33
      %p35 = scmp.ne.s32.totalorder %s27, %s30
      %p36 = scmp.eq.s32.totalorder %s17, 0
      %p37 = por %p35, %p36
      %p38 = scmp.ne.s32.totalorder %s27, %s30
      %p39 = scmp.eq.s32.totalorder %s22, 1
      %p40 = por %p38, %p39
      %p41 = scmp.ne.s32.totalorder %s30, %s31
      %p42 = scmp.eq.s32.totalorder %s22, 0
      %p43 = por %p41, %p42
      %p44 = scmp.ne.s32.totalorder %s30, %s31
      %p45 = scmp.eq.s32.totalorder %s23, 1
      %p46 = por %p44, %p45
      %p48 = scmp.ne.s32.totalorder %s31, %s47
      %p49 = scmp.eq.s32.totalorder %s23, 0
      %p50 = por %p48, %p49
      %s52 = sadd.s32 %s51, 1
      %p55 = scmp.eq.s32.totalorder %s17, 1
      %p56 = scmp.ne.s32.totalorder %s51, %s53
      %p57 = scmp.eq.s32.totalorder %s17, 0
      %p58 = por %p56, %p57
      %p59 = scmp.ne.s32.totalorder %s51, %s53
      %p60 = scmp.eq.s32.totalorder %s22, 1
      %p61 = por %p59, %p60
      %p62 = scmp.ne.s32.totalorder %s53, %s54
      %p63 = scmp.eq.s32.totalorder %s22, 0
      %p64 = por %p62, %p63
      %p65 = scmp.ne.s32.totalorder %s53, %s54
      %p66 = scmp.eq.s32.totalorder %s23, 1
      %p67 = por %p65, %p66
      %p69 = scmp.ne.s32.totalorder %s54, %s68
      %p70 = scmp.eq.s32.totalorder %s23, 0
      %p71 = por %p69, %p70
      %s73 = sadd.s32 %s72, 1
      %p76 = scmp.eq.s32.totalorder %s17, 1
      %p77 = scmp.ne.s32.totalorder %s72, %s74
      %p78 = scmp.eq.s32.totalorder %s17, 0
      %p79 = por %p77, %p78
      %p80 = scmp.ne.s32.totalorder %s72, %s74
      %p81 = scmp.eq.s32.totalorder %s22, 1
      %p82 = por %p80, %p81
      %p83 = scmp.ne.s32.totalorder %s74, %s75
      %p84 = scmp.eq.s32.totalorder %s22, 0
      %p85 = por %p83, %p84
      %p86 = scmp.ne.s32.totalorder %s74, %s75
      %p87 = scmp.eq.s32.totalorder %s23, 1
      %p88 = por %p86, %p87
      %p90 = scmp.ne.s32.totalorder %s75, %s89
      %p91 = scmp.eq.s32.totalorder %s23, 0
      %p92 = por %p90, %p91
      %s93 = ssub.s32 %s17, %s24
      %p94 = scmp.eq.s32.totalorder %s93, 0
      %s96 = sadd.s32 %s95, 1
      %s97 = scalar_select %p94, %s95, %s96
      %p100 = pneg %p94
      %p101 = scmp.eq.s32.totalorder %s17, 1
      %p102 = por %p100, %p101
      %p103 = scmp.ne.s32.totalorder %s95, %s98
      %p104 = scmp.eq.s32.totalorder %s17, 0
      %p105 = por %p103, %p104
      %p106 = scmp.ne.s32.totalorder %s95, %s98
      %p107 = scmp.eq.s32.totalorder %s22, 1
      %p108 = por %p106, %p107
      %p109 = scmp.ne.s32.totalorder %s98, %s99
      %p110 = scmp.eq.s32.totalorder %s22, 0
      %p111 = por %p109, %p110
      %p112 = scmp.ne.s32.totalorder %s98, %s99
      %p113 = scmp.eq.s32.totalorder %s23, 1
      %p114 = por %p112, %p113
      %p116 = scmp.ne.s32.totalorder %s99, %s115
      %p117 = scmp.eq.s32.totalorder %s23, 0
      %p118 = por %p116, %p117
      %p119 = scmp.le.s32.totalorder 1, %s17
      %p120 = scmp.lt.s32.totalorder %s17, 3
      %p121 = pnand %p119, %p120
      %p122 = pneg %p121
      // Predicated region
      $region9: #{tpu_custom_call.1} parent=5 // pred_check
        _
      $region10: #{tpu_custom_call.1} parent=5 // pred_check_branch
        %124 = sbr.rel (%p121) target = $region12
      $region11: #{tpu_custom_call.1} parent=5 // pred_region
        %s125 = ssub.s32 %s17, 1
        // Predicated region
        $region13: #{tpu_custom_call.1} parent=11 // pred_check
          %p126 = pneg %p64
        $region14: #{tpu_custom_call.1} parent=11 // pred_check_branch
          %128 = sbr.rel (%p126) target = $region16
        $region15: #{tpu_custom_call.1} parent=11 // pred_region
          %s130 = ssub.s32 256, 256
          %131 = vsyncadd [#allocation7], %s130
          %s132 = sshll.u32 [#allocation6], 4
          %s133 = int_to_ptr.vmem [resolvable:$true] %s132
          %138 = dma.hbm_to_vmem [thread:$0]  %s1, 256, %s133, [#allocation7], 128, 128, 8
        $region16: #{tpu_custom_call.1} parent=11 // pred_fallthru
          _
        // Predicated region
        $region17: #{tpu_custom_call.1} parent=11 // pred_check
          %p139 = pneg %p85
        $region18: #{tpu_custom_call.1} parent=11 // pred_check_branch
          %141 = sbr.rel (%p139) target = $region20
        $region19: #{tpu_custom_call.1} parent=11 // pred_region
          _
        $region20: #{tpu_custom_call.1} parent=11 // pred_fallthru
          _
      $region12: #{tpu_custom_call.1} parent=5 // pred_fallthru
        _
      %p142 = scmp.lt.s32.totalorder %s17, 2
      // Predicated region
      $region21: #{tpu_custom_call.1} parent=5 // pred_check
        %p143 = pneg %p142
      $region22: #{tpu_custom_call.1} parent=5 // pred_check_branch
        %145 = sbr.rel (%p143) target = $region24
      $region23: #{tpu_custom_call.1} parent=5 // pred_region
        // Predicated region
        $region25: #{tpu_custom_call.1} parent=23 // pred_check
          %p146 = pneg %p37
        $region26: #{tpu_custom_call.1} parent=23 // pred_check_branch
          %148 = sbr.rel (%p146) target = $region28
        $region27: #{tpu_custom_call.1} parent=23 // pred_region
          %s149 = sand.u32 %s27, 1
          %s150 = scalar_lea.sflag [#allocation4], %s149
          %s151 = sand.u32 %s27, 1
          %s152 = smul.addr %s151, 416
          %s153 = scalar_lea.vmem [#allocation3], %s152
          %s155 = ssub.s32 6656, 6656
          %156 = vsyncadd %s150, %s155
          %s157 = smul.addr %s17, 52
          %s158 = smul.addr %s157, 128
          %s159 = scalar_lea.hbm %s0, %s158
          %s160 = sshll.u32 %s153, 4
          %s161 = int_to_ptr.vmem [resolvable:$true] %s160
          %166 = dma.hbm_to_vmem [thread:$0]  %s159, 6656, %s161, %s150, 512, 512, 32
        $region28: #{tpu_custom_call.1} parent=23 // pred_fallthru
          _
      $region24: #{tpu_custom_call.1} parent=5 // pred_fallthru
        _
      %p167 = scmp.le.s32.totalorder 1, %s17
      %p168 = scmp.lt.s32.totalorder %s17, 3
      %p169 = pnand %p167, %p168
      %p170 = pneg %p169
      // Predicated region
      $region29: #{tpu_custom_call.1} parent=5 // pred_check
        _
      $region30: #{tpu_custom_call.1} parent=5 // pred_check_branch
        %172 = sbr.rel (%p169) target = $region32
      $region31: #{tpu_custom_call.1} parent=5 // pred_region
        %s173 = ssub.s32 %s17, 1
        %s174 = sand.u32 %s30, 1
        %s175 = scalar_lea.sflag [#allocation4], %s174
        %s176 = sand.u32 %s30, 1
        %s177 = smul.addr %s176, 416
        %s178 = scalar_lea.vmem [#allocation3], %s177
        // Predicated region
        $region33: #{tpu_custom_call.1} parent=31 // pred_check
          %p179 = pneg %p43
        $region34: #{tpu_custom_call.1} parent=31 // pred_check_branch
          %181 = sbr.rel (%p179) target = $region36
        $region35: #{tpu_custom_call.1} parent=31 // pred_region
          %182 = dma.done %s175, 6656
        $region36: #{tpu_custom_call.1} parent=31 // pred_fallthru
          _
        // Predicated region
        $region37: #{tpu_custom_call.1} parent=31 // pred_check
          %p183 = pneg %p64
        $region38: #{tpu_custom_call.1} parent=31 // pred_check_branch
          %185 = sbr.rel (%p183) target = $region40
        $region39: #{tpu_custom_call.1} parent=31 // pred_region
          %186 = dma.done [#allocation7], 256
        $region40: #{tpu_custom_call.1} parent=31 // pred_fallthru
          _
        %s187 = sand.u32 %s30, 1
        %s188 = scalar_lea.sflag [#allocation4], %s187
        %s189 = sand.u32 %s30, 1
        %s190 = smul.addr %s189, 416
        %s191 = scalar_lea.vmem [#allocation3], %s190
        %p192 = pneg %p43
        %p193 = pneg %p40
        %p194 = pneg %p64
        %p195 = pneg %p61
        %p196 = pneg %p85
        %p197 = pneg %p82
        %p198 = pneg %p111
        %p199 = pneg %p108
        %s200 = sand.u32 %s98, 1
        %s201 = scalar_lea.sflag [#allocation5], %s200
        %s202 = sand.u32 %s98, 1
        %s203 = smul.addr %s202, 3
        %s204 = scalar_lea.vmem [#allocation8], %s203
        %s205 = sld [smem:[#allocation2]]
        %v206 = vld [vmem:[#allocation6] sm:$0xff]
        %v207 = vld [vmem:[#allocation6 + $0x8] sm:$0xff]
        %v208 = vld [vmem:[%s178] sm:$0xff]
        %v209 = vld [vmem:[%s178 + $0x8] sm:$0xff]
        %v210 = vld [vmem:[%s178 + $0x10] sm:$0xff]
        %v211 = vld [vmem:[%s178 + $0x18] sm:$0xff]
        %v212 = vld [vmem:[%s178 + $0x20] sm:$0xff]
        %v213 = vld [vmem:[%s178 + $0x28] sm:$0xff]
        %v214 = vld [vmem:[%s178 + $0x30] sm:$0xff]
        %v215 = vld [vmem:[%s178 + $0x38] sm:$0xff]
        %v216 = vld [vmem:[%s178 + $0x40] sm:$0xff]
        %v217 = vld [vmem:[%s178 + $0x48] sm:$0xff]
        %v218 = vld [vmem:[%s178 + $0x50] sm:$0xff]
        %v219 = vld [vmem:[%s178 + $0x58] sm:$0xff]
        %v220 = vld [vmem:[%s178 + $0x60] sm:$0xff]
        %v221 = vld [vmem:[%s178 + $0x68] sm:$0xff]
        %v222 = vld [vmem:[%s178 + $0x70] sm:$0xff]
        %v223 = vld [vmem:[%s178 + $0x78] sm:$0xff]
        %v224 = vld [vmem:[%s178 + $0x80] sm:$0xff]
        %v225 = vld [vmem:[%s178 + $0x88] sm:$0xff]
        %v226 = vld [vmem:[%s178 + $0x90] sm:$0xff]
        %v227 = vld [vmem:[%s178 + $0x98] sm:$0xff]
        %v228 = vld [vmem:[%s178 + $0xa0] sm:$0xff]
        %v229 = vld [vmem:[%s178 + $0xa8] sm:$0xff]
        %v230 = vld [vmem:[%s178 + $0xb0] sm:$0xff]
        %v231 = vld [vmem:[%s178 + $0xb8] sm:$0xff]
        %v232 = vld [vmem:[%s178 + $0xc0] sm:$0xff]
        %v233 = vld [vmem:[%s178 + $0xc8] sm:$0xff]
        %v234 = vld [vmem:[%s178 + $0xd0] sm:$0xff]
        %v235 = vld [vmem:[%s178 + $0xd8] sm:$0xff]
        %v236 = vld [vmem:[%s178 + $0xe0] sm:$0xff]
        %v237 = vld [vmem:[%s178 + $0xe8] sm:$0xff]
        %v238 = vld [vmem:[%s178 + $0xf0] sm:$0xff]
        %v239 = vld [vmem:[%s178 + $0xf8] sm:$0xff]
        %v240 = vld [vmem:[%s178 + $0x100] sm:$0xff]
        %v241 = vld [vmem:[%s178 + $0x108] sm:$0xff]
        %v242 = vld [vmem:[%s178 + $0x110] sm:$0xff]
        %v243 = vld [vmem:[%s178 + $0x118] sm:$0xff]
        %v244 = vld [vmem:[%s178 + $0x120] sm:$0xff]
        %v245 = vld [vmem:[%s178 + $0x128] sm:$0xff]
        %v246 = vld [vmem:[%s178 + $0x130] sm:$0xff]
        %v247 = vld [vmem:[%s178 + $0x138] sm:$0xff]
        %v248 = vld [vmem:[%s178 + $0x140] sm:$0xff]
        %v249 = vld [vmem:[%s178 + $0x148] sm:$0xff]
        %v250 = vld [vmem:[%s178 + $0x150] sm:$0xff]
        %v251 = vld [vmem:[%s178 + $0x158] sm:$0xff]
        %v252 = vld [vmem:[%s178 + $0x160] sm:$0xff]
        %v253 = vld [vmem:[%s178 + $0x168] sm:$0xff]
        %v254 = vld [vmem:[%s178 + $0x170] sm:$0xff]
        %v255 = vld [vmem:[%s178 + $0x178] sm:$0xff]
        %v256 = vld [vmem:[%s178 + $0x180] sm:$0xff]
        %v257 = vld [vmem:[%s178 + $0x188] sm:$0xff]
        %v258 = vld [vmem:[%s178 + $0x190] sm:$0xff]
        %v259 = vld [vmem:[%s178 + $0x198] sm:$0xff]
        %vm260 = vcmask 850944
        %v262 = vsel %vm260, %v206, 0
        %v265 = vsel %vm260, %v207, 0
        %267 = vmatprep.subr.mxu0 %v209
        %268 = vmatpush1.msra.mxu0 %v208
        %269 = vmatprep.subr.mxu0 %v213
        %270 = vmatpush1.msra.mxu0 %v212
        %271 = vmatprep.subr.mxu0 %v217
        %272 = vmatpush1.msra.mxu0 %v216
        %273 = vmatprep.subr.mxu0 %v221
        %274 = vmatpush1.msra.mxu0 %v220
        %275 = vmatprep.subr.mxu0 %v225
        %276 = vmatpush1.msra.mxu0 %v224
        %277 = vmatprep.subr.mxu0 %v229
        %278 = vmatpush1.msra.mxu0 %v228
        %279 = vmatprep.subr.mxu0 %v233
        %280 = vmatpush1.msra.mxu0 %v232
        %281 = vmatprep.subr.mxu0 %v237
        %282 = vmatpush1.msra.mxu0 %v236
        %283 = vmatprep.subr.mxu0 %v241
        %284 = vmatpush1.msra.mxu0 %v240
        %285 = vmatprep.subr.mxu0 %v245
        %286 = vmatpush1.msra.mxu0 %v244
        %287 = vmatprep.subr.mxu0 %v249
        %288 = vmatpush1.msra.mxu0 %v248
        %289 = vmatprep.subr.mxu0 %v253
        %290 = vmatpush1.msra.mxu0 %v252
        %291 = vmatprep.subr.mxu0 %v257
        %292 = vmatpush1.msra.mxu0 %v256
        %293 = vmatprep.subr.mxu0 0.0
        %294 = vmatpush1.msra.mxu0 0.0
        %295 = vmatprep.subr.mxu0 0.0
        %296 = vmatpush1.msra.mxu0 0.0
        %297 = vmatprep.subr.mxu0 0.0
        %298 = vmatpush1.msra.mxu0 0.0
        %299 = vmatprep.subr.mxu0 0.0
        %300 = vmatpush1.msra.mxu0 0.0
        %301 = vmatprep.subr.mxu0 0.0
        %302 = vmatpush1.msra.mxu0 0.0
        %303 = vmatprep.subr.mxu0 0.0
        %304 = vmatpush1.msra.mxu0 0.0
        %305 = vmatprep.subr.mxu0 0.0
        %306 = vmatpush1.msra.mxu0 0.0
        %307 = vmatprep.subr.mxu0 0.0
        %308 = vmatpush1.msra.mxu0 0.0
        %309 = vmatprep.subr.mxu0 0.0
        %310 = vmatpush1.msra.mxu0 0.0
        %311 = vmatprep.subr.mxu0 0.0
        %312 = vmatpush1.msra.mxu0 0.0
        %313 = vmatprep.subr.mxu0 0.0
        %314 = vmatpush1.msra.mxu0 0.0
        %315 = vmatprep.subr.mxu0 0.0
        %316 = vmatpush1.msra.mxu0 0.0
        %317 = vmatprep.subr.mxu0 0.0
        %318 = vmatpush1.msra.mxu0 0.0
        %319 = vmatprep.subr.mxu0 0.0
        %320 = vmatpush1.msra.mxu0 0.0
        %321 = vmatprep.subr.mxu0 0.0
        %322 = vmatpush1.msra.mxu0 0.0
        %323 = vmatprep.subr.mxu0 0.0
        %324 = vmatpush1.msra.mxu0 0.0
        %325 = vmatprep.subr.mxu0 0.0
        %326 = vmatpush1.msra.mxu0 0.0
        %327 = vmatprep.subr.mxu0 0.0
        %328 = vmatpush1.msra.mxu0 0.0
        %329 = vmatprep.subr.mxu0 0.0
        %330 = vmatpush1.msra.mxu0 0.0
        %331 = vmatprep.mubr.f32.mxu0 0.0
        %332 = vmatmul.mubr.f32.gmra.mrb[0].mxu0 %v262
        %v333 = vpop.f32.mrb[0].mxu0
        %v334 = vadd.f32 0.0, %v333
        %v335 = vpop.f32.mrb[0].mxu0
        %v336 = vadd.f32 0.0, %v335
        %337 = vmatprep.mubr.f32.mxu0 0.0
        %338 = vmatmul.mubr.f32.gmra.mrb[0].mxu0 %v265
        %v339 = vpop.f32.mrb[0].mxu0
        %v340 = vadd.f32 0.0, %v339
        %v341 = vpop.f32.mrb[0].mxu0
        %v342 = vadd.f32 0.0, %v341
        %343 = vdwg.mxu0
        %344 = vmatprep.subr.mxu0 %v211
        %345 = vmatpush1.msra.mxu0 %v210
        %346 = vmatprep.subr.mxu0 %v215
        %347 = vmatpush1.msra.mxu0 %v214
        %348 = vmatprep.subr.mxu0 %v219
        %349 = vmatpush1.msra.mxu0 %v218
        %350 = vmatprep.subr.mxu0 %v223
        %351 = vmatpush1.msra.mxu0 %v222
        %352 = vmatprep.subr.mxu0 %v227
        %353 = vmatpush1.msra.mxu0 %v226
        %354 = vmatprep.subr.mxu0 %v231
        %355 = vmatpush1.msra.mxu0 %v230
        %356 = vmatprep.subr.mxu0 %v235
        %357 = vmatpush1.msra.mxu0 %v234
        %358 = vmatprep.subr.mxu0 %v239
        %359 = vmatpush1.msra.mxu0 %v238
        %360 = vmatprep.subr.mxu0 %v243
        %361 = vmatpush1.msra.mxu0 %v242
        %362 = vmatprep.subr.mxu0 %v247
        %363 = vmatpush1.msra.mxu0 %v246
        %364 = vmatprep.subr.mxu0 %v251
        %365 = vmatpush1.msra.mxu0 %v250
        %366 = vmatprep.subr.mxu0 %v255
        %367 = vmatpush1.msra.mxu0 %v254
        %368 = vmatprep.subr.mxu0 %v259
        %369 = vmatpush1.msra.mxu0 %v258
        %370 = vmatprep.subr.mxu0 0.0
        %371 = vmatpush1.msra.mxu0 0.0
        %372 = vmatprep.subr.mxu0 0.0
        %373 = vmatpush1.msra.mxu0 0.0
        %374 = vmatprep.subr.mxu0 0.0
        %375 = vmatpush1.msra.mxu0 0.0
        %376 = vmatprep.subr.mxu0 0.0
        %377 = vmatpush1.msra.mxu0 0.0
        %378 = vmatprep.subr.mxu0 0.0
        %379 = vmatpush1.msra.mxu0 0.0
        %380 = vmatprep.subr.mxu0 0.0
        %381 = vmatpush1.msra.mxu0 0.0
        %382 = vmatprep.subr.mxu0 0.0
        %383 = vmatpush1.msra.mxu0 0.0
        %384 = vmatprep.subr.mxu0 0.0
        %385 = vmatpush1.msra.mxu0 0.0
        %386 = vmatprep.subr.mxu0 0.0
        %387 = vmatpush1.msra.mxu0 0.0
        %388 = vmatprep.subr.mxu0 0.0
        %389 = vmatpush1.msra.mxu0 0.0
        %390 = vmatprep.subr.mxu0 0.0
        %391 = vmatpush1.msra.mxu0 0.0
        %392 = vmatprep.subr.mxu0 0.0
        %393 = vmatpush1.msra.mxu0 0.0
        %394 = vmatprep.subr.mxu0 0.0
        %395 = vmatpush1.msra.mxu0 0.0
        %396 = vmatprep.subr.mxu0 0.0
        %397 = vmatpush1.msra.mxu0 0.0
        %398 = vmatprep.subr.mxu0 0.0
        %399 = vmatpush1.msra.mxu0 0.0
        %400 = vmatprep.subr.mxu0 0.0
        %401 = vmatpush1.msra.mxu0 0.0
        %402 = vmatprep.subr.mxu0 0.0
        %403 = vmatpush1.msra.mxu0 0.0
        %404 = vmatprep.subr.mxu0 0.0
        %405 = vmatpush1.msra.mxu0 0.0
        %406 = vmatprep.subr.mxu0 0.0
        %407 = vmatpush1.msra.mxu0 0.0
        %408 = vmatprep.mubr.f32.mxu0 0.0
        %409 = vmatmul.mubr.f32.gmra.mrb[0].mxu0 %v262
        %v410 = vpop.f32.mrb[0].mxu0
        %v411 = vadd.f32 0.0, %v410
        %v412 = vpop.f32.mrb[0].mxu0
        %v413 = vadd.f32 0.0, %v412
        %414 = vmatprep.mubr.f32.mxu0 0.0
        %415 = vmatmul.mubr.f32.gmra.mrb[0].mxu0 %v265
        %v416 = vpop.f32.mrb[0].mxu0
        %v417 = vadd.f32 0.0, %v416
        %v418 = vpop.f32.mrb[0].mxu0
        %v419 = vadd.f32 0.0, %v418
        %420 = vdwg.mxu0
        %v425 = vrot.slane %v334, 1
        %v426 = vrot.slane %v336, 1
        %v427 = vrot.slane %v411, 1
        %v428 = vrot.slane %v413, 1
        %429 = vrot.lane.b32.xlu0 %v425, 127
        %v430 = vpop.permute.xlu0 %429
        %431 = vrot.lane.b32.xlu0 %v426, 127
        %v432 = vpop.permute.xlu0 %431
        %433 = vrot.lane.b32.xlu0 %v427, 127
        %v434 = vpop.permute.xlu0 %433
        %435 = vrot.lane.b32.xlu0 %v428, 127
        %v436 = vpop.permute.xlu0 %435
        %vm437 = vcmask 1039360
        %v438 = vsel %vm437, %v430, %v432
        %v439 = vsel %vm437, %v432, %v434
        %v440 = vsel %vm437, %v434, %v436
        %v444 = vadd.f32 %v334, %v438
        %v445 = vadd.f32 %v336, %v439
        %v446 = vadd.f32 %v411, %v440
        %447 = vrot.lane.b32.xlu0 %v425, 112
        %v448 = vpop.permute.xlu0 %447
        %449 = vrot.lane.b32.xlu0 %v426, 112
        %v450 = vpop.permute.xlu0 %449
        %451 = vrot.lane.b32.xlu0 %v427, 112
        %v452 = vpop.permute.xlu0 %451
        %453 = vrot.lane.b32.xlu0 %v428, 112
        %v454 = vpop.permute.xlu0 %453
        %vm455 = vcmask 916480
        %v456 = vsel %vm455, %v448, %v450
        %v457 = vsel %vm455, %v450, %v452
        %v458 = vsel %vm455, %v452, %v454
        %v463 = vadd.f32 %v334, %v456
        %v464 = vadd.f32 %v336, %v457
        %v465 = vadd.f32 %v411, %v458
        %v466 = vadd.f32 %v413, %v454
        %v468 = vadd.f32 %v413, %v436
        %v473 = vrot.slane %v463, 2
        %v474 = vrot.slane %v464, 2
        %v475 = vrot.slane %v465, 2
        %v476 = vrot.slane %v466, 2
        %477 = vrot.lane.b32.xlu0 %v473, 126
        %v478 = vpop.permute.xlu0 %477
        %479 = vrot.lane.b32.xlu0 %v474, 126
        %v480 = vpop.permute.xlu0 %479
        %481 = vrot.lane.b32.xlu0 %v475, 126
        %v482 = vpop.permute.xlu0 %481
        %483 = vrot.lane.b32.xlu0 %v476, 126
        %v484 = vpop.permute.xlu0 %483
        %vm485 = vcmask 1031168
        %v486 = vsel %vm485, %v478, %v480
        %v487 = vsel %vm485, %v480, %v482
        %v488 = vsel %vm485, %v482, %v484
        %v492 = vadd.f32 %v444, %v486
        %v493 = vadd.f32 %v445, %v487
        %v494 = vadd.f32 %v446, %v488
        %v499 = vrot.slane %v444, 2
        %v500 = vrot.slane %v445, 2
        %v501 = vrot.slane %v446, 2
        %v502 = vrot.slane %v468, 2
        %503 = vrot.lane.b32.xlu0 %v499, 111
        %v504 = vpop.permute.xlu0 %503
        %505 = vrot.lane.b32.xlu0 %v500, 111
        %v506 = vpop.permute.xlu0 %505
        %507 = vrot.lane.b32.xlu0 %v501, 111
        %v508 = vpop.permute.xlu0 %507
        %509 = vrot.lane.b32.xlu0 %v502, 111
        %v510 = vpop.permute.xlu0 %509
        %vm511 = vcmask 908288
        %v512 = vsel %vm511, %v504, %v506
        %v513 = vsel %vm511, %v506, %v508
        %v514 = vsel %vm511, %v508, %v510
        %v519 = vadd.f32 %v444, %v512
        %v520 = vadd.f32 %v445, %v513
        %v521 = vadd.f32 %v446, %v514
        %v522 = vadd.f32 %v468, %v510
        %v527 = vrot.slane %v519, 4
        %v528 = vrot.slane %v520, 4
        %v529 = vrot.slane %v521, 4
        %v530 = vrot.slane %v522, 4
        %531 = vrot.lane.b32.xlu0 %v527, 109
        %v532 = vpop.permute.xlu0 %531
        %533 = vrot.lane.b32.xlu0 %v528, 109
        %v534 = vpop.permute.xlu0 %533
        %535 = vrot.lane.b32.xlu0 %v529, 109
        %v536 = vpop.permute.xlu0 %535
        %537 = vrot.lane.b32.xlu0 %v530, 109
        %v538 = vpop.permute.xlu0 %537
        %vm539 = vcmask 891904
        %v540 = vsel %vm539, %v532, %v534
        %v541 = vsel %vm539, %v534, %v536
        %v542 = vsel %vm539, %v536, %v538
        %v546 = vadd.f32 %v492, %v540
        %v547 = vadd.f32 %v493, %v541
        %v548 = vadd.f32 %v494, %v542
        %553 = vrot.lane.b32.xlu0 %v340, 90
        %v554 = vpop.permute.xlu0 %553
        %555 = vrot.lane.b32.xlu0 %v342, 90
        %v556 = vpop.permute.xlu0 %555
        %557 = vrot.lane.b32.xlu0 %v417, 90
        %v558 = vpop.permute.xlu0 %557
        %559 = vrot.lane.b32.xlu0 %v419, 90
        %v560 = vpop.permute.xlu0 %559
        %vm561 = vcmask 736256
        %v562 = vsel %vm561, %v554, %v556
        %v563 = vsel %vm561, %v556, %v558
        %v564 = vsel %vm561, %v558, %v560
        %v568 = vadd.f32 %v546, %v562
        %v569 = vadd.f32 %v547, %v563
        %v570 = vadd.f32 %v548, %v564
        %v571 = vstv %s205
        %v572 = vadd.f32 %v568, %v571
        %v573 = vadd.f32 %v569, %v571
        %v574 = vadd.f32 %v570, %v571
        %v575 = vxor.u32 %v572, 2147483648
        %v576 = vxor.u32 %v573, 2147483648
        %v577 = vxor.u32 %v574, 2147483648
        %v578 = vmul.f32 %v575, 1.442695
        %v579 = vpow.pop %v578
        %v580 = vmul.f32 %v576, 1.442695
        %v581 = vpow.pop %v580
        %v582 = vmul.f32 %v577, 1.442695
        %v583 = vpow.pop %v582
        %v584 = vadd.f32 %v579, 1.0
        %v585 = vadd.f32 %v581, 1.0
        %v586 = vadd.f32 %v583, 1.0
        %v587 = vrcp.pop %v584
        %v588 = vmul.f32 1.0, %v587
        %v589 = vrcp.pop %v585
        %v590 = vmul.f32 1.0, %v589
        %v591 = vrcp.pop %v586
        %v592 = vmul.f32 1.0, %v591
        %v596 = vcombine.low %v588, %v590
        %v598 = vunpack.c.l.s4 1966171168
        %v599 = vunpack.c.0.s8 %v598
        %v600 = vlaneseq
        %v601 = vshrl.u32 %v600, 7
        %v602 = vsub.s32 %v599, %v601
        %v603 = vrot.slane %v596, %v602
        %v605 = vunpack.c.l.s4 1966171168
        %v606 = vunpack.c.0.s8 %v605
        %v607 = vlaneseq
        %v608 = vshrl.u32 %v607, 7
        %v609 = vsub.s32 %v606, %v608
        %v610 = vrot.slane %v592, %v609
        %v611 = vcombine.low %v603, %v610
        %v613 = vunpack.c.l.s4 1966171168
        %v614 = vunpack.c.0.s8 %v613
        %v615 = vlaneseq
        %v616 = vshrl.u32 %v615, 7
        %v617 = vsub.s32 %v614, %v616
        %v618 = vrot.slane %v611, %v617
        %v620 = vlaneseq
        %vm621 = vcmp.ge.s32.totalorder %v620, 0
        %vm622 = vcmp.lt.s32.totalorder %v620, 384
        %vm623 = vmand %vm621, %vm622
        %624 = vst.msk [vmem:[%s204] sm:$0x7] %vm623, %v618
        %s625 = sand.u32 %s98, 1
        %s626 = scalar_lea.sflag [#allocation5], %s625
        %s627 = sand.u32 %s98, 1
        %s628 = smul.addr %s627, 3
        %s629 = scalar_lea.vmem [#allocation8], %s628
        // Predicated region
        $region41: #{tpu_custom_call.1} parent=31 // pred_check
          %p630 = pneg %p108
        $region42: #{tpu_custom_call.1} parent=31 // pred_check_branch
          %632 = sbr.rel (%p630) target = $region44
        $region43: #{tpu_custom_call.1} parent=31 // pred_region
          %s634 = ssub.s32 48, 48
          %635 = vsyncadd %s626, %s634
          %s636 = smul.addr %s22, 3
          %s637 = smul.addr %s636, 16
          %s638 = scalar_lea.hbm %s3, %s637
          %s640 = sshll.u32 %s629, 4
          %s641 = int_to_ptr.vmem [resolvable:$true] %s640
          %643 = dma.vmem_to_hbm [thread:$0]  %s641, 48, %s638, %s626
        $region44: #{tpu_custom_call.1} parent=31 // pred_fallthru
          _
      $region32: #{tpu_custom_call.1} parent=5 // pred_fallthru
        _
      %p644 = scmp.le.s32.totalorder 2, %s17
      // Predicated region
      $region45: #{tpu_custom_call.1} parent=5 // pred_check
        %p645 = pneg %p644
      $region46: #{tpu_custom_call.1} parent=5 // pred_check_branch
        %647 = sbr.rel (%p645) target = $region48
      $region47: #{tpu_custom_call.1} parent=5 // pred_region
        %s648 = ssub.s32 %s17, 2
        // Predicated region
        $region49: #{tpu_custom_call.1} parent=47 // pred_check
          %p649 = pneg %p114
        $region50: #{tpu_custom_call.1} parent=47 // pred_check_branch
          %651 = sbr.rel (%p649) target = $region52
        $region51: #{tpu_custom_call.1} parent=47 // pred_region
          %s652 = sand.u32 %s99, 1
          %s653 = scalar_lea.sflag [#allocation5], %s652
          %s654 = sand.u32 %s99, 1
          %s655 = smul.addr %s654, 3
          %s656 = scalar_lea.vmem [#allocation8], %s655
          %657 = dma.done %s653, 48
        $region52: #{tpu_custom_call.1} parent=47 // pred_fallthru
          _
      $region48: #{tpu_custom_call.1} parent=5 // pred_fallthru
        _
    $region6: #{tpu_custom_call.1} parent=1 // loop_footer
      %s21 = sadd.s32 1, %s17
    $region7: #{tpu_custom_call.1} parent=1 // loop_footer_branch
      %16 = sbr.rel target = $region3
    $region8: #{tpu_custom_call.1} parent=1 // loop_exit
      _
    %658 = vsyncpa [#allocation4], 1
    %s659 = scalar_lea.sflag [#allocation4], 1
    %660 = vsyncpa %s659, 1
    %661 = vsyncpa [#allocation7], 1
    %662 = vsyncpa [#allocation5], 1
    %s663 = scalar_lea.sflag [#allocation5], 1
    %664 = vsyncpa %s663, 1

</llo_original>
